<compile_context>
chip_gen: v6e
topology: v6e:2x2x1
jax: 0.10.0
libtpu: 0.0.40
codegen_flags: <defaults>
</compile_context>

<pallas_src>
import jax
import jax.numpy as jnp
from jax import lax
from jax.experimental import pallas as pl
from jax.experimental.pallas import tpu as pltpu


def _mha_kernel(q_ref, k_ref, v_ref,
                wq_ref, bq_ref, wk_ref, bk_ref, wv_ref, bv_ref,
                wo_ref, bo_ref,
                x_ref, attn_ref,
                acc_ref):
    """One grid step == one (batch, head) pair.

    Ref shapes (leading batch/head dims squeezed away by the BlockSpecs):
      q/k/v_ref : [S, H]
      wq/wk/wv  : [H, d]   (per-head slab; wq is pre-scaled by 1/sqrt(d))
      bq/bk/bv  : [1, d]
      wo_ref    : [d, H]   (per-head rows of the output projection)
      bo_ref    : [1, H]
      x_ref     : [S, H]   (written once, at the last head)
      attn_ref  : [S, S]   (per-(batch, head) lane-dense slab)
      acc_ref   : [S, H]   fp32 accumulator scratch (persists across the head axis)
    """
    h = pl.program_id(1)
    last_h = pl.num_programs(1) - 1

    # Per-head projections, fp32 MXU accumulation.  wq/bq already carry 1/sqrt(d).
    Qh = jnp.dot(q_ref[...], wq_ref[...], preferred_element_type=jnp.float32) + bq_ref[...]
    Kh = jnp.dot(k_ref[...], wk_ref[...], preferred_element_type=jnp.float32) + bk_ref[...]
    Vh = jnp.dot(v_ref[...], wv_ref[...], preferred_element_type=jnp.float32) + bv_ref[...]

    # energy = Q K^T: contract over head_dim directly, no materialized transpose.
    energy = lax.dot_general(
        Qh, Kh,
        dimension_numbers=(((1,), (1,)), ((), ())),
        preferred_element_type=jnp.float32)                       # [S, S]

    # Numerically stable softmax; reciprocal goes to the (otherwise idle) EUP slot.
    m = jnp.max(energy, axis=-1, keepdims=True)
    e = jnp.exp(energy - m)
    denom = jnp.sum(e, axis=-1, keepdims=True)
    attn = e * pl.reciprocal(denom, approx=True)                  # [S, S]

    attn_ref[...] = attn.astype(attn_ref.dtype)

    # Per-head context and its contribution to the output projection.
    ctx = jnp.dot(attn, Vh, preferred_element_type=jnp.float32)   # [S, d]

    @pl.when(h == 0)
    def _init():
        acc_ref[...] = jnp.broadcast_to(bo_ref[...], acc_ref.shape)

    acc_ref[...] += jnp.dot(ctx, wo_ref[...], preferred_element_type=jnp.float32)

    @pl.when(h == last_h)
    def _finalize():
        x_ref[...] = acc_ref[...].astype(x_ref.dtype)


def mha_pallas(query, key, value, params, *, n_heads):
    """Forward pass of MultiHeadAttentionLayer (eval mode, mask=None).

    params = (wq, bq, wk, bk, wv, bv, wo, bo) with weights stored [H_in, H_out].
    Returns (x [B,S,H], attention [B,n_heads,S,S]).
    """
    B, S, H = query.shape
    assert H % n_heads == 0
    d = H // n_heads
    inv_scale = 1.0 / (float(d) ** 0.5)

    wq, bq, wk, bk, wv, bv, wo, bo = params

    # Fold the attention scale into the Q projection (zero in-kernel cost).
    wq = wq * inv_scale
    bq = bq * inv_scale

    # Pre-split every projection weight per head so each kernel block is a full
    # trailing slab (legal for any head_dim, no in-kernel sub-lane slicing).
    def split_out(w, b):          # [H,H] -> [nh,H,d],  [H] -> [nh,1,d]
        return (w.reshape(H, n_heads, d).transpose(1, 0, 2),
                b.reshape(n_heads, 1, d))

    wq_h, bq_h = split_out(wq, bq)
    wk_h, bk_h = split_out(wk, bk)
    wv_h, bv_h = split_out(wv, bv)
    wo_h = wo.reshape(n_heads, d, H)       # rows of wo belonging to head h
    bo_r = bo.reshape(1, H)

    sq = pl.Squeezed()
    inp_spec = pl.BlockSpec((sq, S, H), lambda b, h: (b, 0, 0))
    w_in_spec = pl.BlockSpec((sq, H, d), lambda b, h: (h, 0, 0))
    b_in_spec = pl.BlockSpec((sq, 1, d), lambda b, h: (h, 0, 0))
    wo_spec = pl.BlockSpec((sq, d, H), lambda b, h: (h, 0, 0))
    bo_spec = pl.BlockSpec((1, H), lambda b, h: (0, 0))

    out_shapes = (
        jax.ShapeDtypeStruct((B, S, H), query.dtype),
        jax.ShapeDtypeStruct((B, n_heads, S, S), jnp.float32),
    )
    out_specs = (
        pl.BlockSpec((sq, S, H), lambda b, h: (b, 0, 0)),          # x: revisited over h
        pl.BlockSpec((sq, sq, S, S), lambda b, h: (b, h, 0, 0)),   # attn: lane-dense slab
    )

    return pl.pallas_call(
        _mha_kernel,
        out_shape=out_shapes,
        grid_spec=pltpu.PrefetchScalarGridSpec(
            num_scalar_prefetch=0,
            grid=(B, n_heads),
            in_specs=[inp_spec, inp_spec, inp_spec,
                      w_in_spec, b_in_spec,
                      w_in_spec, b_in_spec,
                      w_in_spec, b_in_spec,
                      wo_spec, bo_spec],
            out_specs=out_specs,
            scratch_shapes=[pltpu.VMEM((S, H), jnp.float32)],
        ),
        compiler_params=pltpu.CompilerParams(
            dimension_semantics=("parallel", "arbitrary")),
    )(query, key, value, wq_h, bq_h, wk_h, bk_h, wv_h, bv_h, wo_h, bo_r)


def mha_reference(query, key, value, params, *, n_heads):
    """Pure-JAX reference mirroring the PyTorch forward (eval mode, mask=None)."""
    wq, bq, wk, bk, wv, bv, wo, bo = params
    B, S, H = query.shape
    d = H // n_heads
    scale = jnp.sqrt(jnp.float32(d))

    def split(x):  # [B,S,H] -> [B,nh,S,d]
        return x.reshape(B, S, n_heads, d).transpose(0, 2, 1, 3)

    Q = split(query @ wq + bq)
    K = split(key @ wk + bk)
    V = split(value @ wv + bv)

    energy = jnp.einsum("bhqd,bhkd->bhqk", Q, K) / scale
    attn = jax.nn.softmax(energy, axis=-1)
    x = jnp.einsum("bhqk,bhkd->bhqd", attn, V)
    x = x.transpose(0, 2, 1, 3).reshape(B, S, H)
    x = x @ wo + bo
    return x, attn


if __name__ == "__main__":
    # Small, module-consistent shapes.
    B, S, H, n_heads = 2, 8, 32, 4

    key0 = jax.random.PRNGKey(0)
    ks = jax.random.split(key0, 12)

    def w(k):
        return jax.random.normal(k, (H, H), jnp.float32) * 0.05

    def bias(k):
        return jax.random.normal(k, (H,), jnp.float32) * 0.01

    params = (w(ks[0]), bias(ks[1]),   # fc_q
              w(ks[2]), bias(ks[3]),   # fc_k
              w(ks[4]), bias(ks[5]),   # fc_v
              w(ks[6]), bias(ks[7]))   # fc_o

    query = jax.random.normal(ks[8], (B, S, H), jnp.float32)
    key_in = jax.random.normal(ks[9], (B, S, H), jnp.float32)
    value = jax.random.normal(ks[10], (B, S, H), jnp.float32)

    out, attn = mha_pallas(query, key_in, value, params, n_heads=n_heads)
    out = jax.block_until_ready(out)
    attn = jax.block_until_ready(attn)

    ref_out, ref_attn = mha_reference(query, key_in, value, params, n_heads=n_heads)

    assert out.shape == (B, S, H)
    assert attn.shape == (B, n_heads, S, S)
    # Tolerances account for pl.reciprocal(approx=True) in the softmax denominator.
    assert jnp.allclose(out, ref_out, atol=1e-3, rtol=1e-3)
    assert jnp.allclose(attn, ref_attn, atol=1e-3, rtol=1e-3)

    print("KERNEL_OK")
</pallas_src>

<mosaic_0001>
module attributes {stable_mosaic.version = 11 : i64} {
  func.func @_mha_kernel(%arg0: i32, %arg1: i32, %arg2: memref<1x8x32xf32, #tpu.memory_space<vmem>>, %arg3: memref<1x8x32xf32, #tpu.memory_space<vmem>>, %arg4: memref<1x8x32xf32, #tpu.memory_space<vmem>>, %arg5: memref<1x32x8xf32, #tpu.memory_space<vmem>>, %arg6: memref<1x1x8xf32, #tpu.memory_space<vmem>>, %arg7: memref<1x32x8xf32, #tpu.memory_space<vmem>>, %arg8: memref<1x1x8xf32, #tpu.memory_space<vmem>>, %arg9: memref<1x32x8xf32, #tpu.memory_space<vmem>>, %arg10: memref<1x1x8xf32, #tpu.memory_space<vmem>>, %arg11: memref<1x8x32xf32, #tpu.memory_space<vmem>>, %arg12: memref<1x32xf32, #tpu.memory_space<vmem>>, %arg13: memref<1x8x32xf32, #tpu.memory_space<vmem>>, %arg14: memref<1x1x8x8xf32, #tpu.memory_space<vmem>>, %arg15: memref<8x32xf32, #tpu.memory_space<vmem>>) attributes {dimension_semantics = [#tpu.dimension_semantics<parallel>, #tpu.dimension_semantics<arbitrary>], iteration_bounds = array<i64: 2, 4>, scalar_prefetch = 0 : i64, scratch_operands = 1 : i64, tpu.core_type = #tpu.core_type<tc>, window_params = [{transform_indices = @transform_0, window_bounds = array<i64: 1, 8, 32>}, {transform_indices = @transform_1, window_bounds = array<i64: 1, 8, 32>}, {transform_indices = @transform_2, window_bounds = array<i64: 1, 8, 32>}, {transform_indices = @transform_3, window_bounds = array<i64: 1, 32, 8>}, {transform_indices = @transform_4, window_bounds = array<i64: 1, 1, 8>}, {transform_indices = @transform_5, window_bounds = array<i64: 1, 32, 8>}, {transform_indices = @transform_6, window_bounds = array<i64: 1, 1, 8>}, {transform_indices = @transform_7, window_bounds = array<i64: 1, 32, 8>}, {transform_indices = @transform_8, window_bounds = array<i64: 1, 1, 8>}, {transform_indices = @transform_9, window_bounds = array<i64: 1, 8, 32>}, {pipeline_mode = #tpu.pipeline_mode<synchronous>, transform_indices = @transform_10, window_bounds = array<i64: 1, 32>}, {transform_indices = @transform_11, window_bounds = array<i64: 1, 8, 32>}, {transform_indices = @transform_12, window_bounds = array<i64: 1, 1, 8, 8>}]} {
    %c0 = arith.constant 0 : index
    %c0_0 = arith.constant 0 : index
    %c0_1 = arith.constant 0 : index
    %0 = vector.load %arg2[%c0, %c0_0, %c0_1] : memref<1x8x32xf32, #tpu.memory_space<vmem>>, vector<1x8x32xf32>
    %1 = vector.shape_cast %0 : vector<1x8x32xf32> to vector<8x32xf32>
    %c0_2 = arith.constant 0 : index
    %c0_3 = arith.constant 0 : index
    %c0_4 = arith.constant 0 : index
    %2 = vector.load %arg5[%c0_2, %c0_3, %c0_4] : memref<1x32x8xf32, #tpu.memory_space<vmem>>, vector<1x32x8xf32>
    %3 = vector.shape_cast %2 : vector<1x32x8xf32> to vector<32x8xf32>
    %cst = arith.constant dense<0.000000e+00> : vector<8x8xf32>
    %4 = tpu.matmul %1, %3, %cst {dimension_numbers = #tpu.dot_dimension_numbers<[1], [0], [0], [1], [0, 0, 1, 1], [], []>} : vector<8x32xf32>, vector<32x8xf32>, vector<8x8xf32> -> vector<8x8xf32>
    %c0_5 = arith.constant 0 : index
    %c0_6 = arith.constant 0 : index
    %c0_7 = arith.constant 0 : index
    %5 = vector.load %arg6[%c0_5, %c0_6, %c0_7] : memref<1x1x8xf32, #tpu.memory_space<vmem>>, vector<1x1x8xf32>
    %6 = vector.shape_cast %5 : vector<1x1x8xf32> to vector<1x8xf32>
    %7 = vector.broadcast %6 : vector<1x8xf32> to vector<8x8xf32>
    %8 = arith.addf %4, %7 : vector<8x8xf32>
    %c0_8 = arith.constant 0 : index
    %c0_9 = arith.constant 0 : index
    %c0_10 = arith.constant 0 : index
    %9 = vector.load %arg3[%c0_8, %c0_9, %c0_10] : memref<1x8x32xf32, #tpu.memory_space<vmem>>, vector<1x8x32xf32>
    %10 = vector.shape_cast %9 : vector<1x8x32xf32> to vector<8x32xf32>
    %c0_11 = arith.constant 0 : index
    %c0_12 = arith.constant 0 : index
    %c0_13 = arith.constant 0 : index
    %11 = vector.load %arg7[%c0_11, %c0_12, %c0_13] : memref<1x32x8xf32, #tpu.memory_space<vmem>>, vector<1x32x8xf32>
    %12 = vector.shape_cast %11 : vector<1x32x8xf32> to vector<32x8xf32>
    %cst_14 = arith.constant dense<0.000000e+00> : vector<8x8xf32>
    %13 = tpu.matmul %10, %12, %cst_14 {dimension_numbers = #tpu.dot_dimension_numbers<[1], [0], [0], [1], [0, 0, 1, 1], [], []>} : vector<8x32xf32>, vector<32x8xf32>, vector<8x8xf32> -> vector<8x8xf32>
    %c0_15 = arith.constant 0 : index
    %c0_16 = arith.constant 0 : index
    %c0_17 = arith.constant 0 : index
    %14 = vector.load %arg8[%c0_15, %c0_16, %c0_17] : memref<1x1x8xf32, #tpu.memory_space<vmem>>, vector<1x1x8xf32>
    %15 = vector.shape_cast %14 : vector<1x1x8xf32> to vector<1x8xf32>
    %16 = vector.broadcast %15 : vector<1x8xf32> to vector<8x8xf32>
    %17 = arith.addf %13, %16 : vector<8x8xf32>
    %c0_18 = arith.constant 0 : index
    %c0_19 = arith.constant 0 : index
    %c0_20 = arith.constant 0 : index
    %18 = vector.load %arg4[%c0_18, %c0_19, %c0_20] : memref<1x8x32xf32, #tpu.memory_space<vmem>>, vector<1x8x32xf32>
    %19 = vector.shape_cast %18 : vector<1x8x32xf32> to vector<8x32xf32>
    %c0_21 = arith.constant 0 : index
    %c0_22 = arith.constant 0 : index
    %c0_23 = arith.constant 0 : index
    %20 = vector.load %arg9[%c0_21, %c0_22, %c0_23] : memref<1x32x8xf32, #tpu.memory_space<vmem>>, vector<1x32x8xf32>
    %21 = vector.shape_cast %20 : vector<1x32x8xf32> to vector<32x8xf32>
    %cst_24 = arith.constant dense<0.000000e+00> : vector<8x8xf32>
    %22 = tpu.matmul %19, %21, %cst_24 {dimension_numbers = #tpu.dot_dimension_numbers<[1], [0], [0], [1], [0, 0, 1, 1], [], []>} : vector<8x32xf32>, vector<32x8xf32>, vector<8x8xf32> -> vector<8x8xf32>
    %c0_25 = arith.constant 0 : index
    %c0_26 = arith.constant 0 : index
    %c0_27 = arith.constant 0 : index
    %23 = vector.load %arg10[%c0_25, %c0_26, %c0_27] : memref<1x1x8xf32, #tpu.memory_space<vmem>>, vector<1x1x8xf32>
    %24 = vector.shape_cast %23 : vector<1x1x8xf32> to vector<1x8xf32>
    %25 = vector.broadcast %24 : vector<1x8xf32> to vector<8x8xf32>
    %26 = arith.addf %22, %25 : vector<8x8xf32>
    %cst_28 = arith.constant dense<0.000000e+00> : vector<8x8xf32>
    %27 = tpu.matmul %8, %17, %cst_28 {dimension_numbers = #tpu.dot_dimension_numbers<[1], [1], [0], [0], [0, 0, 1, 0], [], []>} : vector<8x8xf32>, vector<8x8xf32>, vector<8x8xf32> -> vector<8x8xf32>
    %cst_29 = arith.constant dense<0xFF800000> : vector<8xf32>
    %28 = vector.multi_reduction <maximumf>, %27, %cst_29 [1] : vector<8x8xf32> to vector<8xf32>
    %29 = vector.shape_cast %28 : vector<8xf32> to vector<8x1xf32>
    %30 = vector.broadcast %29 : vector<8x1xf32> to vector<8x8xf32>
    %31 = arith.subf %27, %30 : vector<8x8xf32>
    %32 = math.exp %31 : vector<8x8xf32>
    %cst_30 = arith.constant dense<0.000000e+00> : vector<8xf32>
    %33 = vector.multi_reduction <add>, %32, %cst_30 [1] : vector<8x8xf32> to vector<8xf32>
    %34 = vector.shape_cast %33 : vector<8xf32> to vector<8x1xf32>
    %35 = tpu.reciprocal %34 {approx = true} : vector<8x1xf32> -> vector<8x1xf32>
    %36 = vector.broadcast %35 : vector<8x1xf32> to vector<8x8xf32>
    %37 = arith.mulf %32, %36 : vector<8x8xf32>
    %c0_31 = arith.constant 0 : index
    %c0_32 = arith.constant 0 : index
    %c0_33 = arith.constant 0 : index
    %c0_34 = arith.constant 0 : index
    %38 = vector.load %arg14[%c0_31, %c0_32, %c0_33, %c0_34] : memref<1x1x8x8xf32, #tpu.memory_space<vmem>>, vector<1x1x8x8xf32>
    %39 = vector.shape_cast %38 : vector<1x1x8x8xf32> to vector<8x8xf32>
    %40 = vector.shape_cast %37 : vector<8x8xf32> to vector<1x1x8x8xf32>
    tpu.vector_store %arg14[%c0_31, %c0_32, %c0_33, %c0_34], %40 {strides = array<i32>} : memref<1x1x8x8xf32, #tpu.memory_space<vmem>>, vector<1x1x8x8xf32>,
    %cst_35 = arith.constant dense<0.000000e+00> : vector<8x8xf32>
    %41 = tpu.matmul %37, %26, %cst_35 {dimension_numbers = #tpu.dot_dimension_numbers<[1], [0], [0], [1], [0, 0, 1, 1], [], []>} : vector<8x8xf32>, vector<8x8xf32>, vector<8x8xf32> -> vector<8x8xf32>
    %c0_i32 = arith.constant 0 : i32
    %42 = arith.cmpi eq, %arg1, %c0_i32 : i32
    %43 = arith.extui %42 : i1 to i32
    %c0_i32_36 = arith.constant 0 : i32
    %44 = arith.cmpi ne, %43, %c0_i32_36 : i32
    scf.if %44 {
      %c0_46 = arith.constant 0 : index
      %c0_47 = arith.constant 0 : index
      %54 = vector.load %arg12[%c0_46, %c0_47] : memref<1x32xf32, #tpu.memory_space<vmem>>, vector<1x32xf32>
      %55 = vector.shape_cast %54 : vector<1x32xf32> to vector<1x32xf32>
      %56 = vector.broadcast %55 : vector<1x32xf32> to vector<8x32xf32>
      %c0_48 = arith.constant 0 : index
      %c0_49 = arith.constant 0 : index
      %57 = vector.load %arg15[%c0_48, %c0_49] : memref<8x32xf32, #tpu.memory_space<vmem>>, vector<8x32xf32>
      tpu.vector_store %arg15[%c0_48, %c0_49], %56 {strides = array<i32>} : memref<8x32xf32, #tpu.memory_space<vmem>>, vector<8x32xf32>,
    } else {
    }
    %c0_37 = arith.constant 0 : index
    %c0_38 = arith.constant 0 : index
    %45 = vector.load %arg15[%c0_37, %c0_38] : memref<8x32xf32, #tpu.memory_space<vmem>>, vector<8x32xf32>
    %c0_39 = arith.constant 0 : index
    %c0_40 = arith.constant 0 : index
    %c0_41 = arith.constant 0 : index
    %46 = vector.load %arg11[%c0_39, %c0_40, %c0_41] : memref<1x8x32xf32, #tpu.memory_space<vmem>>, vector<1x8x32xf32>
    %47 = vector.shape_cast %46 : vector<1x8x32xf32> to vector<8x32xf32>
    %cst_42 = arith.constant dense<0.000000e+00> : vector<8x32xf32>
    %48 = tpu.matmul %41, %47, %cst_42 {dimension_numbers = #tpu.dot_dimension_numbers<[1], [0], [0], [1], [0, 0, 1, 1], [], []>} : vector<8x8xf32>, vector<8x32xf32>, vector<8x32xf32> -> vector<8x32xf32>
    %49 = arith.addf %45, %48 : vector<8x32xf32>
    %c0_43 = arith.constant 0 : index
    %c0_44 = arith.constant 0 : index
    %50 = vector.load %arg15[%c0_43, %c0_44] : memref<8x32xf32, #tpu.memory_space<vmem>>, vector<8x32xf32>
    tpu.vector_store %arg15[%c0_43, %c0_44], %49 {strides = array<i32>} : memref<8x32xf32, #tpu.memory_space<vmem>>, vector<8x32xf32>,
    %c3_i32 = arith.constant 3 : i32
    %51 = arith.cmpi eq, %arg1, %c3_i32 : i32
    %52 = arith.extui %51 : i1 to i32
    %c0_i32_45 = arith.constant 0 : i32
    %53 = arith.cmpi ne, %52, %c0_i32_45 : i32
    scf.if %53 {
      %c0_46 = arith.constant 0 : index
      %c0_47 = arith.constant 0 : index
      %54 = vector.load %arg15[%c0_46, %c0_47] : memref<8x32xf32, #tpu.memory_space<vmem>>, vector<8x32xf32>
      %c0_48 = arith.constant 0 : index
      %c0_49 = arith.constant 0 : index
      %c0_50 = arith.constant 0 : index
      %55 = vector.load %arg13[%c0_48, %c0_49, %c0_50] : memref<1x8x32xf32, #tpu.memory_space<vmem>>, vector<1x8x32xf32>
      %56 = vector.shape_cast %55 : vector<1x8x32xf32> to vector<8x32xf32>
      %57 = vector.shape_cast %54 : vector<8x32xf32> to vector<1x8x32xf32>
      tpu.vector_store %arg13[%c0_48, %c0_49, %c0_50], %57 {strides = array<i32>} : memref<1x8x32xf32, #tpu.memory_space<vmem>>, vector<1x8x32xf32>,
    } else {
    }
    return
  }
  func.func @transform_0(%arg0: i32, %arg1: i32) -> (i32, i32, i32) {
    %c0_i32 = arith.constant 0 : i32
    %c0_i32_0 = arith.constant 0 : i32
    %c0_i32_1 = arith.constant 0 : i32
    return %arg0, %c0_i32, %c0_i32_0 : i32, i32, i32
  }
  func.func @transform_1(%arg0: i32, %arg1: i32) -> (i32, i32, i32) {
    %c0_i32 = arith.constant 0 : i32
    %c0_i32_0 = arith.constant 0 : i32
    %c0_i32_1 = arith.constant 0 : i32
    return %arg0, %c0_i32, %c0_i32_0 : i32, i32, i32
  }
  func.func @transform_2(%arg0: i32, %arg1: i32) -> (i32, i32, i32) {
    %c0_i32 = arith.constant 0 : i32
    %c0_i32_0 = arith.constant 0 : i32
    %c0_i32_1 = arith.constant 0 : i32
    return %arg0, %c0_i32, %c0_i32_0 : i32, i32, i32
  }
  func.func @transform_3(%arg0: i32, %arg1: i32) -> (i32, i32, i32) {
    %c0_i32 = arith.constant 0 : i32
    %c0_i32_0 = arith.constant 0 : i32
    %c0_i32_1 = arith.constant 0 : i32
    return %arg1, %c0_i32, %c0_i32_0 : i32, i32, i32
  }
  func.func @transform_4(%arg0: i32, %arg1: i32) -> (i32, i32, i32) {
    %c0_i32 = arith.constant 0 : i32
    %c0_i32_0 = arith.constant 0 : i32
    %c0_i32_1 = arith.constant 0 : i32
    return %arg1, %c0_i32, %c0_i32_0 : i32, i32, i32
  }
  func.func @transform_5(%arg0: i32, %arg1: i32) -> (i32, i32, i32) {
    %c0_i32 = arith.constant 0 : i32
    %c0_i32_0 = arith.constant 0 : i32
    %c0_i32_1 = arith.constant 0 : i32
    return %arg1, %c0_i32, %c0_i32_0 : i32, i32, i32
  }
  func.func @transform_6(%arg0: i32, %arg1: i32) -> (i32, i32, i32) {
    %c0_i32 = arith.constant 0 : i32
    %c0_i32_0 = arith.constant 0 : i32
    %c0_i32_1 = arith.constant 0 : i32
    return %arg1, %c0_i32, %c0_i32_0 : i32, i32, i32
  }
  func.func @transform_7(%arg0: i32, %arg1: i32) -> (i32, i32, i32) {
    %c0_i32 = arith.constant 0 : i32
    %c0_i32_0 = arith.constant 0 : i32
    %c0_i32_1 = arith.constant 0 : i32
    return %arg1, %c0_i32, %c0_i32_0 : i32, i32, i32
  }
  func.func @transform_8(%arg0: i32, %arg1: i32) -> (i32, i32, i32) {
    %c0_i32 = arith.constant 0 : i32
    %c0_i32_0 = arith.constant 0 : i32
    %c0_i32_1 = arith.constant 0 : i32
    return %arg1, %c0_i32, %c0_i32_0 : i32, i32, i32
  }
  func.func @transform_9(%arg0: i32, %arg1: i32) -> (i32, i32, i32) {
    %c0_i32 = arith.constant 0 : i32
    %c0_i32_0 = arith.constant 0 : i32
    %c0_i32_1 = arith.constant 0 : i32
    return %arg1, %c0_i32, %c0_i32_0 : i32, i32, i32
  }
  func.func @transform_10(%arg0: i32, %arg1: i32) -> (i32, i32) {
    %c0_i32 = arith.constant 0 : i32
    %c0_i32_0 = arith.constant 0 : i32
    %c0_i32_1 = arith.constant 0 : i32
    return %c0_i32, %c0_i32_0 : i32, i32
  }
  func.func @transform_11(%arg0: i32, %arg1: i32) -> (i32, i32, i32) {
    %c0_i32 = arith.constant 0 : i32
    %c0_i32_0 = arith.constant 0 : i32
    %c0_i32_1 = arith.constant 0 : i32
    return %arg0, %c0_i32, %c0_i32_0 : i32, i32, i32
  }
  func.func @transform_12(%arg0: i32, %arg1: i32) -> (i32, i32, i32, i32) {
    %c0_i32 = arith.constant 0 : i32
    %c0_i32_0 = arith.constant 0 : i32
    %c0_i32_1 = arith.constant 0 : i32
    return %arg0, %arg1, %c0_i32, %c0_i32_0 : i32, i32, i32, i32
  }
}

</mosaic_0001>

<llo_original>
// kernel: tpu_custom_call.1
$region0: #{tpu_custom_call.1}
  #allocation0 [shape = 'u32[]', space=smem, size = 0x4, offset = 0x4, fixed_abs, tag = 'smem constant byte address 0x4 - core index']
  #allocation1 [shape = 'u32[144,128]{1,0:T(1,128)}', space=vmem, size = 0x12000, scoped, tag = 'internal scratch']
  #allocation2 [shape = 'f32[8,32]{1,0:T(8,128)}', space=vmem, size = 0x1000, scoped, tag = 'scratch operand']
  %s0 = inlined_call_operand.vmem [shape: f32[2,8,32], index: 0, kind: input, shape index: {}]
  %s1 = inlined_call_operand.vmem [shape: f32[2,8,32], index: 1, kind: input, shape index: {}]
  %s2 = inlined_call_operand.vmem [shape: f32[2,8,32], index: 2, kind: input, shape index: {}]
  %s3 = inlined_call_operand.vmem [shape: f32[4,32,8], index: 3, kind: input, shape index: {}]
  %s4 = inlined_call_operand.vmem [shape: f32[4,1,8], index: 4, kind: input, shape index: {}]
  %s5 = inlined_call_operand.vmem [shape: f32[4,32,8], index: 5, kind: input, shape index: {}]
  %s6 = inlined_call_operand.vmem [shape: f32[4,1,8], index: 6, kind: input, shape index: {}]
  %s7 = inlined_call_operand.vmem [shape: f32[4,32,8], index: 7, kind: input, shape index: {}]
  %s8 = inlined_call_operand.vmem [shape: f32[4,1,8], index: 8, kind: input, shape index: {}]
  %s9 = inlined_call_operand.vmem [shape: f32[4,8,32], index: 9, kind: input, shape index: {}]
  %s10 = inlined_call_operand.vmem [shape: f32[1,32], index: 10, kind: input, shape index: {}]
  %s11 = inlined_call_operand.hbm [shape: f32[2,8,32], index: 11, kind: output, shape index: {0}]
  %s12 = inlined_call_operand.hbm [shape: f32[2,4,8,8], index: 12, kind: output, shape index: {1}]
  %13 = xla_tuple %s11, %s12
  %s14 = sld [smem:[#allocation0]]
  $region93: #{tpu_custom_call.1} parent=0
    _
  %s16 = ssub.s32 1, %s14
  %s17 = scalar_select 0, %s16, %s14
  $region1: #{tpu_custom_call.1} parent=0
    #allocation3 [shape = 'u8[8192]{0}', space=vmem, size = 0x2000, scoped, tag = 'output window, operand 0']
    #allocation4 [shape = 's32[2]{0}', space=sflag, size = 0x8, scoped, tag = 'scoped memory for tpu_custom_call.1']
    #allocation5 [shape = 'u8[8192]{0}', space=vmem, size = 0x2000, scoped, tag = 'output window, operand 1']
    #allocation6 [shape = 's32[2]{0}', space=sflag, size = 0x8, scoped, tag = 'scoped memory for tpu_custom_call.1']
    %18 = vsyncpa [#allocation4], 0
    %s19 = scalar_lea.sflag [#allocation4], 1
    %20 = vsyncpa %s19, 0
    %21 = vsyncpa [#allocation6], 0
    %s22 = scalar_lea.sflag [#allocation6], 1
    %23 = vsyncpa %s22, 0
    loop: start=0, step=1, limit=10
    $region2: #{tpu_custom_call.1} parent=1 // loop_pre_header
      _
    $region3: #{tpu_custom_call.1} parent=1 // loop_header
      %s25 = sphi 0, %s29
      %p26 = scmp.ge.s32.totalorder %s25, 10
      %s32 = sphi 0, %s44
      %s33 = sphi 0, %s40
      %s34 = sphi 0, %s32
      %s35 = sphi 0, %s33
      %s36 = sphi 0, %s34
      %s37 = sphi 0, %s35
      %s47 = sphi 0, %s49
      %s50 = sphi 0, %s47
      %s51 = sphi 0, %s50
      %s67 = sphi 0, %s51
      %s73 = sphi 0, %s75
      %s76 = sphi 0, %s73
      %s77 = sphi 0, %s76
      %s93 = sphi 0, %s77
      %s99 = sphi 0, %s101
      %s102 = sphi 0, %s99
      %s103 = sphi 0, %s102
      %s119 = sphi 0, %s103
      %s125 = sphi 0, %s127
      %s128 = sphi 0, %s125
      %s129 = sphi 0, %s128
      %s145 = sphi 0, %s129
      %s151 = sphi 0, %s153
      %s154 = sphi 0, %s151
      %s155 = sphi 0, %s154
      %s171 = sphi 0, %s155
      %s177 = sphi 0, %s179
      %s180 = sphi 0, %s177
      %s181 = sphi 0, %s180
      %s197 = sphi 0, %s181
      %s203 = sphi 0, %s205
      %s206 = sphi 0, %s203
      %s207 = sphi 0, %s206
      %s223 = sphi 0, %s207
      %s229 = sphi 0, %s231
      %s232 = sphi 0, %s229
      %s233 = sphi 0, %s232
      %s249 = sphi 0, %s233
      %s255 = sphi 0, %s257
      %s258 = sphi 0, %s255
      %s259 = sphi 0, %s258
      %s275 = sphi 0, %s259
      %s281 = sphi 0, %s283
      %s284 = sphi 0, %s281
      %s285 = sphi 0, %s284
      %s301 = sphi 0, %s285
      %s305 = sphi 0, %s305
      %s307 = sphi 0, %s305
      %s308 = sphi 0, %s307
      %s322 = sphi 0, %s308
      %s328 = sphi 0, %s330
      %s331 = sphi 0, %s328
      %s332 = sphi 0, %s331
      %s348 = sphi 0, %s332
      %s356 = sphi 0, %s358
      %s359 = sphi 0, %s356
      %s360 = sphi 0, %s359
      %s376 = sphi 0, %s360
    $region4: #{tpu_custom_call.1} parent=1 // loop_header_branch
      %28 = sbr.rel (%p26) target = $region8
    $region5: #{tpu_custom_call.1} parent=1 // loop_body
      %s30 = ssub.s32 %s25, 1
      %s31 = ssub.s32 %s25, 2
      %s38 = sadd.s32 1, %s33
      %p39 = scmp.ge.s32.totalorder %s38, 4
      %s40 = scalar_select %p39, 0, %s38
      %s41 = sadd.s32 1, %s32
      %s42 = scalar_select %p39, %s41, %s32
      %p43 = scmp.ge.s32.totalorder %s42, 2
      %s44 = scalar_select %p43, 0, %s42
      %s45 = ssub.s32 %s32, %s44
      %p46 = scmp.eq.s32.totalorder %s45, 0
      %s48 = sadd.s32 %s47, 1
      %s49 = scalar_select %p46, %s47, %s48
      %p52 = pneg %p46
      %p53 = scmp.eq.s32.totalorder %s25, 7
      %p54 = por %p52, %p53
      %p55 = scmp.ne.s32.totalorder %s47, %s50
      %p56 = scmp.eq.s32.totalorder %s25, 0
      %p57 = por %p55, %p56
      %p58 = scmp.ne.s32.totalorder %s47, %s50
      %p59 = scmp.eq.s32.totalorder %s30, 7
      %p60 = por %p58, %p59
      %p61 = scmp.ne.s32.totalorder %s50, %s51
      %p62 = scmp.eq.s32.totalorder %s30, 0
      %p63 = por %p61, %p62
      %p64 = scmp.ne.s32.totalorder %s50, %s51
      %p65 = scmp.eq.s32.totalorder %s31, 7
      %p66 = por %p64, %p65
      %p68 = scmp.ne.s32.totalorder %s51, %s67
      %p69 = scmp.eq.s32.totalorder %s31, 0
      %p70 = por %p68, %p69
      %s71 = ssub.s32 %s32, %s44
      %p72 = scmp.eq.s32.totalorder %s71, 0
      %s74 = sadd.s32 %s73, 1
      %s75 = scalar_select %p72, %s73, %s74
      %p78 = pneg %p72
      %p79 = scmp.eq.s32.totalorder %s25, 7
      %p80 = por %p78, %p79
      %p81 = scmp.ne.s32.totalorder %s73, %s76
      %p82 = scmp.eq.s32.totalorder %s25, 0
      %p83 = por %p81, %p82
      %p84 = scmp.ne.s32.totalorder %s73, %s76
      %p85 = scmp.eq.s32.totalorder %s30, 7
      %p86 = por %p84, %p85
      %p87 = scmp.ne.s32.totalorder %s76, %s77
      %p88 = scmp.eq.s32.totalorder %s30, 0
      %p89 = por %p87, %p88
      %p90 = scmp.ne.s32.totalorder %s76, %s77
      %p91 = scmp.eq.s32.totalorder %s31, 7
      %p92 = por %p90, %p91
      %p94 = scmp.ne.s32.totalorder %s77, %s93
      %p95 = scmp.eq.s32.totalorder %s31, 0
      %p96 = por %p94, %p95
      %s97 = ssub.s32 %s32, %s44
      %p98 = scmp.eq.s32.totalorder %s97, 0
      %s100 = sadd.s32 %s99, 1
      %s101 = scalar_select %p98, %s99, %s100
      %p104 = pneg %p98
      %p105 = scmp.eq.s32.totalorder %s25, 7
      %p106 = por %p104, %p105
      %p107 = scmp.ne.s32.totalorder %s99, %s102
      %p108 = scmp.eq.s32.totalorder %s25, 0
      %p109 = por %p107, %p108
      %p110 = scmp.ne.s32.totalorder %s99, %s102
      %p111 = scmp.eq.s32.totalorder %s30, 7
      %p112 = por %p110, %p111
      %p113 = scmp.ne.s32.totalorder %s102, %s103
      %p114 = scmp.eq.s32.totalorder %s30, 0
      %p115 = por %p113, %p114
      %p116 = scmp.ne.s32.totalorder %s102, %s103
      %p117 = scmp.eq.s32.totalorder %s31, 7
      %p118 = por %p116, %p117
      %p120 = scmp.ne.s32.totalorder %s103, %s119
      %p121 = scmp.eq.s32.totalorder %s31, 0
      %p122 = por %p120, %p121
      %s123 = ssub.s32 %s33, %s40
      %p124 = scmp.eq.s32.totalorder %s123, 0
      %s126 = sadd.s32 %s125, 1
      %s127 = scalar_select %p124, %s125, %s126
      %p130 = pneg %p124
      %p131 = scmp.eq.s32.totalorder %s25, 7
      %p132 = por %p130, %p131
      %p133 = scmp.ne.s32.totalorder %s125, %s128
      %p134 = scmp.eq.s32.totalorder %s25, 0
      %p135 = por %p133, %p134
      %p136 = scmp.ne.s32.totalorder %s125, %s128
      %p137 = scmp.eq.s32.totalorder %s30, 7
      %p138 = por %p136, %p137
      %p139 = scmp.ne.s32.totalorder %s128, %s129
      %p140 = scmp.eq.s32.totalorder %s30, 0
      %p141 = por %p139, %p140
      %p142 = scmp.ne.s32.totalorder %s128, %s129
      %p143 = scmp.eq.s32.totalorder %s31, 7
      %p144 = por %p142, %p143
      %p146 = scmp.ne.s32.totalorder %s129, %s145
      %p147 = scmp.eq.s32.totalorder %s31, 0
      %p148 = por %p146, %p147
      %s149 = ssub.s32 %s33, %s40
      %p150 = scmp.eq.s32.totalorder %s149, 0
      %s152 = sadd.s32 %s151, 1
      %s153 = scalar_select %p150, %s151, %s152
      %p156 = pneg %p150
      %p157 = scmp.eq.s32.totalorder %s25, 7
      %p158 = por %p156, %p157
      %p159 = scmp.ne.s32.totalorder %s151, %s154
      %p160 = scmp.eq.s32.totalorder %s25, 0
      %p161 = por %p159, %p160
      %p162 = scmp.ne.s32.totalorder %s151, %s154
      %p163 = scmp.eq.s32.totalorder %s30, 7
      %p164 = por %p162, %p163
      %p165 = scmp.ne.s32.totalorder %s154, %s155
      %p166 = scmp.eq.s32.totalorder %s30, 0
      %p167 = por %p165, %p166
      %p168 = scmp.ne.s32.totalorder %s154, %s155
      %p169 = scmp.eq.s32.totalorder %s31, 7
      %p170 = por %p168, %p169
      %p172 = scmp.ne.s32.totalorder %s155, %s171
      %p173 = scmp.eq.s32.totalorder %s31, 0
      %p174 = por %p172, %p173
      %s175 = ssub.s32 %s33, %s40
      %p176 = scmp.eq.s32.totalorder %s175, 0
      %s178 = sadd.s32 %s177, 1
      %s179 = scalar_select %p176, %s177, %s178
      %p182 = pneg %p176
      %p183 = scmp.eq.s32.totalorder %s25, 7
      %p184 = por %p182, %p183
      %p185 = scmp.ne.s32.totalorder %s177, %s180
      %p186 = scmp.eq.s32.totalorder %s25, 0
      %p187 = por %p185, %p186
      %p188 = scmp.ne.s32.totalorder %s177, %s180
      %p189 = scmp.eq.s32.totalorder %s30, 7
      %p190 = por %p188, %p189
      %p191 = scmp.ne.s32.totalorder %s180, %s181
      %p192 = scmp.eq.s32.totalorder %s30, 0
      %p193 = por %p191, %p192
      %p194 = scmp.ne.s32.totalorder %s180, %s181
      %p195 = scmp.eq.s32.totalorder %s31, 7
      %p196 = por %p194, %p195
      %p198 = scmp.ne.s32.totalorder %s181, %s197
      %p199 = scmp.eq.s32.totalorder %s31, 0
      %p200 = por %p198, %p199
      %s201 = ssub.s32 %s33, %s40
      %p202 = scmp.eq.s32.totalorder %s201, 0
      %s204 = sadd.s32 %s203, 1
      %s205 = scalar_select %p202, %s203, %s204
      %p208 = pneg %p202
      %p209 = scmp.eq.s32.totalorder %s25, 7
      %p210 = por %p208, %p209
      %p211 = scmp.ne.s32.totalorder %s203, %s206
      %p212 = scmp.eq.s32.totalorder %s25, 0
      %p213 = por %p211, %p212
      %p214 = scmp.ne.s32.totalorder %s203, %s206
      %p215 = scmp.eq.s32.totalorder %s30, 7
      %p216 = por %p214, %p215
      %p217 = scmp.ne.s32.totalorder %s206, %s207
      %p218 = scmp.eq.s32.totalorder %s30, 0
      %p219 = por %p217, %p218
      %p220 = scmp.ne.s32.totalorder %s206, %s207
      %p221 = scmp.eq.s32.totalorder %s31, 7
      %p222 = por %p220, %p221
      %p224 = scmp.ne.s32.totalorder %s207, %s223
      %p225 = scmp.eq.s32.totalorder %s31, 0
      %p226 = por %p224, %p225
      %s227 = ssub.s32 %s33, %s40
      %p228 = scmp.eq.s32.totalorder %s227, 0
      %s230 = sadd.s32 %s229, 1
      %s231 = scalar_select %p228, %s229, %s230
      %p234 = pneg %p228
      %p235 = scmp.eq.s32.totalorder %s25, 7
      %p236 = por %p234, %p235
      %p237 = scmp.ne.s32.totalorder %s229, %s232
      %p238 = scmp.eq.s32.totalorder %s25, 0
      %p239 = por %p237, %p238
      %p240 = scmp.ne.s32.totalorder %s229, %s232
      %p241 = scmp.eq.s32.totalorder %s30, 7
      %p242 = por %p240, %p241
      %p243 = scmp.ne.s32.totalorder %s232, %s233
      %p244 = scmp.eq.s32.totalorder %s30, 0
      %p245 = por %p243, %p244
      %p246 = scmp.ne.s32.totalorder %s232, %s233
      %p247 = scmp.eq.s32.totalorder %s31, 7
      %p248 = por %p246, %p247
      %p250 = scmp.ne.s32.totalorder %s233, %s249
      %p251 = scmp.eq.s32.totalorder %s31, 0
      %p252 = por %p250, %p251
      %s253 = ssub.s32 %s33, %s40
      %p254 = scmp.eq.s32.totalorder %s253, 0
      %s256 = sadd.s32 %s255, 1
      %s257 = scalar_select %p254, %s255, %s256
      %p260 = pneg %p254
      %p261 = scmp.eq.s32.totalorder %s25, 7
      %p262 = por %p260, %p261
      %p263 = scmp.ne.s32.totalorder %s255, %s258
      %p264 = scmp.eq.s32.totalorder %s25, 0
      %p265 = por %p263, %p264
      %p266 = scmp.ne.s32.totalorder %s255, %s258
      %p267 = scmp.eq.s32.totalorder %s30, 7
      %p268 = por %p266, %p267
      %p269 = scmp.ne.s32.totalorder %s258, %s259
      %p270 = scmp.eq.s32.totalorder %s30, 0
      %p271 = por %p269, %p270
      %p272 = scmp.ne.s32.totalorder %s258, %s259
      %p273 = scmp.eq.s32.totalorder %s31, 7
      %p274 = por %p272, %p273
      %p276 = scmp.ne.s32.totalorder %s259, %s275
      %p277 = scmp.eq.s32.totalorder %s31, 0
      %p278 = por %p276, %p277
      %s279 = ssub.s32 %s33, %s40
      %p280 = scmp.eq.s32.totalorder %s279, 0
      %s282 = sadd.s32 %s281, 1
      %s283 = scalar_select %p280, %s281, %s282
      %p286 = pneg %p280
      %p287 = scmp.eq.s32.totalorder %s25, 7
      %p288 = por %p286, %p287
      %p289 = scmp.ne.s32.totalorder %s281, %s284
      %p290 = scmp.eq.s32.totalorder %s25, 0
      %p291 = por %p289, %p290
      %p292 = scmp.ne.s32.totalorder %s281, %s284
      %p293 = scmp.eq.s32.totalorder %s30, 7
      %p294 = por %p292, %p293
      %p295 = scmp.ne.s32.totalorder %s284, %s285
      %p296 = scmp.eq.s32.totalorder %s30, 0
      %p297 = por %p295, %p296
      %p298 = scmp.ne.s32.totalorder %s284, %s285
      %p299 = scmp.eq.s32.totalorder %s31, 7
      %p300 = por %p298, %p299
      %p302 = scmp.ne.s32.totalorder %s285, %s301
      %p303 = scmp.eq.s32.totalorder %s31, 0
      %p304 = por %p302, %p303
      %s306 = sadd.s32 %s305, 1
      %p309 = scmp.eq.s32.totalorder %s25, 7
      %p310 = scmp.ne.s32.totalorder %s305, %s307
      %p311 = scmp.eq.s32.totalorder %s25, 0
      %p312 = por %p310, %p311
      %p313 = scmp.ne.s32.totalorder %s305, %s307
      %p314 = scmp.eq.s32.totalorder %s30, 7
      %p315 = por %p313, %p314
      %p316 = scmp.ne.s32.totalorder %s307, %s308
      %p317 = scmp.eq.s32.totalorder %s30, 0
      %p318 = por %p316, %p317
      %p319 = scmp.ne.s32.totalorder %s307, %s308
      %p320 = scmp.eq.s32.totalorder %s31, 7
      %p321 = por %p319, %p320
      %p323 = scmp.ne.s32.totalorder %s308, %s322
      %p324 = scmp.eq.s32.totalorder %s31, 0
      %p325 = por %p323, %p324
      %s326 = ssub.s32 %s32, %s44
      %p327 = scmp.eq.s32.totalorder %s326, 0
      %s329 = sadd.s32 %s328, 1
      %s330 = scalar_select %p327, %s328, %s329
      %p333 = pneg %p327
      %p334 = scmp.eq.s32.totalorder %s25, 7
      %p335 = por %p333, %p334
      %p336 = scmp.ne.s32.totalorder %s328, %s331
      %p337 = scmp.eq.s32.totalorder %s25, 0
      %p338 = por %p336, %p337
      %p339 = scmp.ne.s32.totalorder %s328, %s331
      %p340 = scmp.eq.s32.totalorder %s30, 7
      %p341 = por %p339, %p340
      %p342 = scmp.ne.s32.totalorder %s331, %s332
      %p343 = scmp.eq.s32.totalorder %s30, 0
      %p344 = por %p342, %p343
      %p345 = scmp.ne.s32.totalorder %s331, %s332
      %p346 = scmp.eq.s32.totalorder %s31, 7
      %p347 = por %p345, %p346
      %p349 = scmp.ne.s32.totalorder %s332, %s348
      %p350 = scmp.eq.s32.totalorder %s31, 0
      %p351 = por %p349, %p350
      %s352 = ssub.s32 %s32, %s44
      %s353 = ssub.s32 %s33, %s40
      %s354 = sor.u32 %s352, %s353
      %p355 = scmp.eq.s32.totalorder %s354, 0
      %s357 = sadd.s32 %s356, 1
      %s358 = scalar_select %p355, %s356, %s357
      %p361 = pneg %p355
      %p362 = scmp.eq.s32.totalorder %s25, 7
      %p363 = por %p361, %p362
      %p364 = scmp.ne.s32.totalorder %s356, %s359
      %p365 = scmp.eq.s32.totalorder %s25, 0
      %p366 = por %p364, %p365
      %p367 = scmp.ne.s32.totalorder %s356, %s359
      %p368 = scmp.eq.s32.totalorder %s30, 7
      %p369 = por %p367, %p368
      %p370 = scmp.ne.s32.totalorder %s359, %s360
      %p371 = scmp.eq.s32.totalorder %s30, 0
      %p372 = por %p370, %p371
      %p373 = scmp.ne.s32.totalorder %s359, %s360
      %p374 = scmp.eq.s32.totalorder %s31, 7
      %p375 = por %p373, %p374
      %p377 = scmp.ne.s32.totalorder %s360, %s376
      %p378 = scmp.eq.s32.totalorder %s31, 0
      %p379 = por %p377, %p378
      %p380 = scmp.le.s32.totalorder 1, %s25
      %p381 = scmp.lt.s32.totalorder %s25, 9
      %p382 = pnand %p380, %p381
      %p383 = pneg %p382
      // Predicated region
      $region9: #{tpu_custom_call.1} parent=5 // pred_check
        _
      $region10: #{tpu_custom_call.1} parent=5 // pred_check_branch
        %385 = sbr.rel (%p382) target = $region12
      $region11: #{tpu_custom_call.1} parent=5 // pred_region
        %s386 = ssub.s32 %s25, 1
        // Predicated region
        $region13: #{tpu_custom_call.1} parent=11 // pred_check
          %p387 = pneg %p318
        $region14: #{tpu_custom_call.1} parent=11 // pred_check_branch
          %389 = sbr.rel (%p387) target = $region16
        $region15: #{tpu_custom_call.1} parent=11 // pred_region
          _
        $region16: #{tpu_custom_call.1} parent=11 // pred_fallthru
          _
      $region12: #{tpu_custom_call.1} parent=5 // pred_fallthru
        _
      %p390 = scmp.lt.s32.totalorder %s25, 8
      // Predicated region
      $region17: #{tpu_custom_call.1} parent=5 // pred_check
        %p391 = pneg %p390
      $region18: #{tpu_custom_call.1} parent=5 // pred_check_branch
        %393 = sbr.rel (%p391) target = $region20
      $region19: #{tpu_custom_call.1} parent=5 // pred_region
        // Predicated region
        $region21: #{tpu_custom_call.1} parent=19 // pred_check
          %p394 = pneg %p57
        $region22: #{tpu_custom_call.1} parent=19 // pred_check_branch
          %396 = sbr.rel (%p394) target = $region24
        $region23: #{tpu_custom_call.1} parent=19 // pred_region
          %p397 = scmp.lt.s32.totalorder %s32, 1
          %s398 = scalar_select %p397, %s32, 1
          %s399 = smul.addr %s398, 8
          %s400 = scalar_lea.vmem %s0, %s399
        $region24: #{tpu_custom_call.1} parent=19 // pred_fallthru
          _
        // Predicated region
        $region25: #{tpu_custom_call.1} parent=19 // pred_check
          %p401 = pneg %p83
        $region26: #{tpu_custom_call.1} parent=19 // pred_check_branch
          %403 = sbr.rel (%p401) target = $region28
        $region27: #{tpu_custom_call.1} parent=19 // pred_region
          %p404 = scmp.lt.s32.totalorder %s32, 1
          %s405 = scalar_select %p404, %s32, 1
          %s406 = smul.addr %s405, 8
          %s407 = scalar_lea.vmem %s1, %s406
        $region28: #{tpu_custom_call.1} parent=19 // pred_fallthru
          _
        // Predicated region
        $region29: #{tpu_custom_call.1} parent=19 // pred_check
          %p408 = pneg %p109
        $region30: #{tpu_custom_call.1} parent=19 // pred_check_branch
          %410 = sbr.rel (%p408) target = $region32
        $region31: #{tpu_custom_call.1} parent=19 // pred_region
          %p411 = scmp.lt.s32.totalorder %s32, 1
          %s412 = scalar_select %p411, %s32, 1
          %s413 = smul.addr %s412, 8
          %s414 = scalar_lea.vmem %s2, %s413
        $region32: #{tpu_custom_call.1} parent=19 // pred_fallthru
          _
        // Predicated region
        $region33: #{tpu_custom_call.1} parent=19 // pred_check
          %p415 = pneg %p135
        $region34: #{tpu_custom_call.1} parent=19 // pred_check_branch
          %417 = sbr.rel (%p415) target = $region36
        $region35: #{tpu_custom_call.1} parent=19 // pred_region
          %p418 = scmp.lt.s32.totalorder %s33, 3
          %s419 = scalar_select %p418, %s33, 3
          %s420 = smul.addr %s419, 4
          %s421 = smul.addr %s420, 8
          %s422 = scalar_lea.vmem %s3, %s421
        $region36: #{tpu_custom_call.1} parent=19 // pred_fallthru
          _
        // Predicated region
        $region37: #{tpu_custom_call.1} parent=19 // pred_check
          %p423 = pneg %p161
        $region38: #{tpu_custom_call.1} parent=19 // pred_check_branch
          %425 = sbr.rel (%p423) target = $region40
        $region39: #{tpu_custom_call.1} parent=19 // pred_region
          %p426 = scmp.lt.s32.totalorder %s33, 3
          %s427 = scalar_select %p426, %s33, 3
          %s428 = scalar_lea.vmem %s4, %s427
        $region40: #{tpu_custom_call.1} parent=19 // pred_fallthru
          _
        // Predicated region
        $region41: #{tpu_custom_call.1} parent=19 // pred_check
          %p429 = pneg %p187
        $region42: #{tpu_custom_call.1} parent=19 // pred_check_branch
          %431 = sbr.rel (%p429) target = $region44
        $region43: #{tpu_custom_call.1} parent=19 // pred_region
          %p432 = scmp.lt.s32.totalorder %s33, 3
          %s433 = scalar_select %p432, %s33, 3
          %s434 = smul.addr %s433, 4
          %s435 = smul.addr %s434, 8
          %s436 = scalar_lea.vmem %s5, %s435
        $region44: #{tpu_custom_call.1} parent=19 // pred_fallthru
          _
        // Predicated region
        $region45: #{tpu_custom_call.1} parent=19 // pred_check
          %p437 = pneg %p213
        $region46: #{tpu_custom_call.1} parent=19 // pred_check_branch
          %439 = sbr.rel (%p437) target = $region48
        $region47: #{tpu_custom_call.1} parent=19 // pred_region
          %p440 = scmp.lt.s32.totalorder %s33, 3
          %s441 = scalar_select %p440, %s33, 3
          %s442 = scalar_lea.vmem %s6, %s441
        $region48: #{tpu_custom_call.1} parent=19 // pred_fallthru
          _
        // Predicated region
        $region49: #{tpu_custom_call.1} parent=19 // pred_check
          %p443 = pneg %p239
        $region50: #{tpu_custom_call.1} parent=19 // pred_check_branch
          %445 = sbr.rel (%p443) target = $region52
        $region51: #{tpu_custom_call.1} parent=19 // pred_region
          %p446 = scmp.lt.s32.totalorder %s33, 3
          %s447 = scalar_select %p446, %s33, 3
          %s448 = smul.addr %s447, 4
          %s449 = smul.addr %s448, 8
          %s450 = scalar_lea.vmem %s7, %s449
        $region52: #{tpu_custom_call.1} parent=19 // pred_fallthru
          _
        // Predicated region
        $region53: #{tpu_custom_call.1} parent=19 // pred_check
          %p451 = pneg %p265
        $region54: #{tpu_custom_call.1} parent=19 // pred_check_branch
          %453 = sbr.rel (%p451) target = $region56
        $region55: #{tpu_custom_call.1} parent=19 // pred_region
          %p454 = scmp.lt.s32.totalorder %s33, 3
          %s455 = scalar_select %p454, %s33, 3
          %s456 = scalar_lea.vmem %s8, %s455
        $region56: #{tpu_custom_call.1} parent=19 // pred_fallthru
          _
        // Predicated region
        $region57: #{tpu_custom_call.1} parent=19 // pred_check
          %p457 = pneg %p291
        $region58: #{tpu_custom_call.1} parent=19 // pred_check_branch
          %459 = sbr.rel (%p457) target = $region60
        $region59: #{tpu_custom_call.1} parent=19 // pred_region
          %p460 = scmp.lt.s32.totalorder %s33, 3
          %s461 = scalar_select %p460, %s33, 3
          %s462 = smul.addr %s461, 8
          %s463 = scalar_lea.vmem %s9, %s462
        $region60: #{tpu_custom_call.1} parent=19 // pred_fallthru
          _
      $region20: #{tpu_custom_call.1} parent=5 // pred_fallthru
        _
      %p464 = scmp.le.s32.totalorder 1, %s25
      %p465 = scmp.lt.s32.totalorder %s25, 9
      %p466 = pnand %p464, %p465
      %p467 = pneg %p466
      // Predicated region
      $region61: #{tpu_custom_call.1} parent=5 // pred_check
        _
      $region62: #{tpu_custom_call.1} parent=5 // pred_check_branch
        %469 = sbr.rel (%p466) target = $region64
      $region63: #{tpu_custom_call.1} parent=5 // pred_region
        %s470 = ssub.s32 %s25, 1
        %p471 = scmp.lt.s32.totalorder %s34, 1
        %s472 = scalar_select %p471, %s34, 1
        %s473 = smul.addr %s472, 8
        %s474 = scalar_lea.vmem %s0, %s473
        %p475 = pneg %p63
        %p476 = pneg %p60
        %p477 = scmp.lt.s32.totalorder %s34, 1
        %s478 = scalar_select %p477, %s34, 1
        %s479 = smul.addr %s478, 8
        %s480 = scalar_lea.vmem %s1, %s479
        %p481 = pneg %p89
        %p482 = pneg %p86
        %p483 = scmp.lt.s32.totalorder %s34, 1
        %s484 = scalar_select %p483, %s34, 1
        %s485 = smul.addr %s484, 8
        %s486 = scalar_lea.vmem %s2, %s485
        %p487 = pneg %p115
        %p488 = pneg %p112
        %p489 = scmp.lt.s32.totalorder %s35, 3
        %s490 = scalar_select %p489, %s35, 3
        %s491 = smul.addr %s490, 4
        %s492 = smul.addr %s491, 8
        %s493 = scalar_lea.vmem %s3, %s492
        %p494 = pneg %p141
        %p495 = pneg %p138
        %p496 = scmp.lt.s32.totalorder %s35, 3
        %s497 = scalar_select %p496, %s35, 3
        %s498 = scalar_lea.vmem %s4, %s497
        %p499 = pneg %p167
        %p500 = pneg %p164
        %p501 = scmp.lt.s32.totalorder %s35, 3
        %s502 = scalar_select %p501, %s35, 3
        %s503 = smul.addr %s502, 4
        %s504 = smul.addr %s503, 8
        %s505 = scalar_lea.vmem %s5, %s504
        %p506 = pneg %p193
        %p507 = pneg %p190
        %p508 = scmp.lt.s32.totalorder %s35, 3
        %s509 = scalar_select %p508, %s35, 3
        %s510 = scalar_lea.vmem %s6, %s509
        %p511 = pneg %p219
        %p512 = pneg %p216
        %p513 = scmp.lt.s32.totalorder %s35, 3
        %s514 = scalar_select %p513, %s35, 3
        %s515 = smul.addr %s514, 4
        %s516 = smul.addr %s515, 8
        %s517 = scalar_lea.vmem %s7, %s516
        %p518 = pneg %p245
        %p519 = pneg %p242
        %p520 = scmp.lt.s32.totalorder %s35, 3
        %s521 = scalar_select %p520, %s35, 3
        %s522 = scalar_lea.vmem %s8, %s521
        %p523 = pneg %p271
        %p524 = pneg %p268
        %p525 = scmp.lt.s32.totalorder %s35, 3
        %s526 = scalar_select %p525, %s35, 3
        %s527 = smul.addr %s526, 8
        %s528 = scalar_lea.vmem %s9, %s527
        %p529 = pneg %p297
        %p530 = pneg %p294
        %p531 = pneg %p318
        %p532 = pneg %p315
        %p533 = pneg %p344
        %p534 = pneg %p341
        %s535 = sand.u32 %s331, 1
        %s536 = scalar_lea.sflag [#allocation4], %s535
        %s537 = sand.u32 %s331, 1
        %s538 = smul.addr %s537, 8
        %s539 = scalar_lea.vmem [#allocation3], %s538
        %p540 = pneg %p372
        %p541 = pneg %p369
        %s542 = sand.u32 %s359, 1
        %s543 = scalar_lea.sflag [#allocation6], %s542
        %s544 = sand.u32 %s359, 1
        %s545 = smul.addr %s544, 8
        %s546 = scalar_lea.vmem [#allocation5], %s545
        %p547 = scmp.lt.s32.totalorder %s34, 1
        %s548 = scalar_select %p547, %s34, 1
        %s549 = smul.addr %s548, 8
        %s550 = scalar_lea.vmem %s0, %s549
        %p551 = scmp.lt.s32.totalorder %s34, 1
        %s552 = scalar_select %p551, %s34, 1
        %s553 = smul.addr %s552, 8
        %s554 = scalar_lea.vmem %s1, %s553
        %p555 = scmp.lt.s32.totalorder %s34, 1
        %s556 = scalar_select %p555, %s34, 1
        %s557 = smul.addr %s556, 8
        %s558 = scalar_lea.vmem %s2, %s557
        %p559 = scmp.lt.s32.totalorder %s35, 3
        %s560 = scalar_select %p559, %s35, 3
        %s561 = smul.addr %s560, 4
        %s562 = smul.addr %s561, 8
        %s563 = scalar_lea.vmem %s3, %s562
        %p564 = scmp.lt.s32.totalorder %s35, 3
        %s565 = scalar_select %p564, %s35, 3
        %s566 = scalar_lea.vmem %s4, %s565
        %p567 = scmp.lt.s32.totalorder %s35, 3
        %s568 = scalar_select %p567, %s35, 3
        %s569 = smul.addr %s568, 4
        %s570 = smul.addr %s569, 8
        %s571 = scalar_lea.vmem %s5, %s570
        %p572 = scmp.lt.s32.totalorder %s35, 3
        %s573 = scalar_select %p572, %s35, 3
        %s574 = scalar_lea.vmem %s6, %s573
        %p575 = scmp.lt.s32.totalorder %s35, 3
        %s576 = scalar_select %p575, %s35, 3
        %s577 = smul.addr %s576, 4
        %s578 = smul.addr %s577, 8
        %s579 = scalar_lea.vmem %s7, %s578
        %p580 = scmp.lt.s32.totalorder %s35, 3
        %s581 = scalar_select %p580, %s35, 3
        %s582 = scalar_lea.vmem %s8, %s581
        %p583 = scmp.lt.s32.totalorder %s35, 3
        %s584 = scalar_select %p583, %s35, 3
        %s585 = smul.addr %s584, 8
        %s586 = scalar_lea.vmem %s9, %s585
        %v587 = vld [vmem:[%s550] sm:$0xff]
        %v588 = vld [vmem:[%s563] sm:$0xff]
        %v589 = vld [vmem:[%s563 + $0x8] sm:$0xff]
        %v590 = vld [vmem:[%s563 + $0x10] sm:$0xff]
        %v591 = vld [vmem:[%s563 + $0x18] sm:$0xff]
        %v592 = vld [vmem:[%s566] sm:$0x1]
        %v594 = vlaneseq
        %v595 = vshrl.u32 %v594, 7
        %v596 = vsub.s32 0, %v595
        %v597 = vrot.slane %v592, %v596
        %vm599 = vcmask 261120
        %v601 = vsel %vm599, %v587, 0
        %603 = vmatprep.subr.mxu0 0.0
        %604 = vmatpush1.msra.mxu0 0.0
        %605 = vmatprep.subr.mxu0 0.0
        %606 = vmatpush1.msra.mxu0 0.0
        %607 = vmatprep.subr.mxu0 0.0
        %608 = vmatpush1.msra.mxu0 0.0
        %609 = vmatprep.subr.mxu0 0.0
        %610 = vmatpush1.msra.mxu0 0.0
        %611 = vmatprep.subr.mxu0 0.0
        %612 = vmatpush1.msra.mxu0 0.0
        %613 = vmatprep.subr.mxu0 0.0
        %614 = vmatpush1.msra.mxu0 0.0
        %615 = vmatprep.subr.mxu0 0.0
        %616 = vmatpush1.msra.mxu0 0.0
        %617 = vmatprep.subr.mxu0 0.0
        %618 = vmatpush1.msra.mxu0 0.0
        %619 = vmatprep.subr.mxu0 0.0
        %620 = vmatpush1.msra.mxu0 0.0
        %621 = vmatprep.subr.mxu0 0.0
        %622 = vmatpush1.msra.mxu0 0.0
        %623 = vmatprep.subr.mxu0 0.0
        %624 = vmatpush1.msra.mxu0 0.0
        %625 = vmatprep.subr.mxu0 0.0
        %626 = vmatpush1.msra.mxu0 0.0
        %627 = vmatprep.subr.mxu0 0.0
        %628 = vmatpush1.msra.mxu0 %v591
        %629 = vmatprep.subr.mxu0 0.0
        %630 = vmatpush1.msra.mxu0 %v590
        %631 = vmatprep.subr.mxu0 0.0
        %632 = vmatpush1.msra.mxu0 %v589
        %633 = vmatprep.subr.mxu0 0.0
        %634 = vmatpush1.msra.mxu0 %v588
        %635 = vmatprep.subr.mxu0 0.0
        %636 = vmatpush2.msra.mxu0 0.0
        %637 = vmatprep.subr.mxu0 0.0
        %638 = vmatpush2.msra.mxu0 0.0
        %639 = vmatprep.subr.mxu0 0.0
        %640 = vmatpush2.msra.mxu0 0.0
        %641 = vmatprep.subr.mxu0 0.0
        %642 = vmatpush2.msra.mxu0 0.0
        %643 = vmatprep.subr.mxu0 0.0
        %644 = vmatpush2.msra.mxu0 0.0
        %645 = vmatprep.subr.mxu0 0.0
        %646 = vmatpush2.msra.mxu0 0.0
        %647 = vmatprep.subr.mxu0 0.0
        %648 = vmatpush2.msra.mxu0 0.0
        %649 = vmatprep.subr.mxu0 0.0
        %650 = vmatpush2.msra.mxu0 0.0
        %651 = vmatprep.subr.mxu0 0.0
        %652 = vmatpush2.msra.mxu0 0.0
        %653 = vmatprep.subr.mxu0 0.0
        %654 = vmatpush2.msra.mxu0 0.0
        %655 = vmatprep.subr.mxu0 0.0
        %656 = vmatpush2.msra.mxu0 0.0
        %657 = vmatprep.subr.mxu0 0.0
        %658 = vmatpush2.msra.mxu0 0.0
        %659 = vmatprep.subr.mxu0 0.0
        %660 = vmatpush2.msra.mxu0 0.0
        %661 = vmatprep.subr.mxu0 0.0
        %662 = vmatpush2.msra.mxu0 0.0
        %663 = vmatprep.subr.mxu0 0.0
        %664 = vmatpush2.msra.mxu0 0.0
        %665 = vmatprep.subr.mxu0 0.0
        %666 = vmatpush2.msra.mxu0 0.0
        %667 = vmatprep.mubr.f32.mxu0 0.0
        %668 = vmatmul.mubr.f32.gmra.mxu0 %v601
        %v669 = vpop.f32.mrf.mxu0
        %v670 = vadd.f32 %v597, %v669
        %v671 = vpop.f32.mrf.mxu0
        %672 = vdwg.mxu0
        %v673 = vld [vmem:[%s554] sm:$0xff]
        %v674 = vld [vmem:[%s571] sm:$0xff]
        %v675 = vld [vmem:[%s571 + $0x8] sm:$0xff]
        %v676 = vld [vmem:[%s571 + $0x10] sm:$0xff]
        %v677 = vld [vmem:[%s571 + $0x18] sm:$0xff]
        %v678 = vld [vmem:[%s574] sm:$0x1]
        %v680 = vlaneseq
        %v681 = vshrl.u32 %v680, 7
        %v682 = vsub.s32 0, %v681
        %v683 = vrot.slane %v678, %v682
        %v686 = vsel %vm599, %v673, 0
        %688 = vmatprep.subr.mxu0 0.0
        %689 = vmatpush1.msra.mxu0 0.0
        %690 = vmatprep.subr.mxu0 0.0
        %691 = vmatpush1.msra.mxu0 0.0
        %692 = vmatprep.subr.mxu0 0.0
        %693 = vmatpush1.msra.mxu0 0.0
        %694 = vmatprep.subr.mxu0 0.0
        %695 = vmatpush1.msra.mxu0 0.0
        %696 = vmatprep.subr.mxu0 0.0
        %697 = vmatpush1.msra.mxu0 0.0
        %698 = vmatprep.subr.mxu0 0.0
        %699 = vmatpush1.msra.mxu0 0.0
        %700 = vmatprep.subr.mxu0 0.0
        %701 = vmatpush1.msra.mxu0 0.0
        %702 = vmatprep.subr.mxu0 0.0
        %703 = vmatpush1.msra.mxu0 0.0
        %704 = vmatprep.subr.mxu0 0.0
        %705 = vmatpush1.msra.mxu0 0.0
        %706 = vmatprep.subr.mxu0 0.0
        %707 = vmatpush1.msra.mxu0 0.0
        %708 = vmatprep.subr.mxu0 0.0
        %709 = vmatpush1.msra.mxu0 0.0
        %710 = vmatprep.subr.mxu0 0.0
        %711 = vmatpush1.msra.mxu0 0.0
        %712 = vmatprep.subr.mxu0 0.0
        %713 = vmatpush1.msra.mxu0 %v677
        %714 = vmatprep.subr.mxu0 0.0
        %715 = vmatpush1.msra.mxu0 %v676
        %716 = vmatprep.subr.mxu0 0.0
        %717 = vmatpush1.msra.mxu0 %v675
        %718 = vmatprep.subr.mxu0 0.0
        %719 = vmatpush1.msra.mxu0 %v674
        %720 = vmatprep.subr.mxu0 0.0
        %721 = vmatpush2.msra.mxu0 0.0
        %722 = vmatprep.subr.mxu0 0.0
        %723 = vmatpush2.msra.mxu0 0.0
        %724 = vmatprep.subr.mxu0 0.0
        %725 = vmatpush2.msra.mxu0 0.0
        %726 = vmatprep.subr.mxu0 0.0
        %727 = vmatpush2.msra.mxu0 0.0
        %728 = vmatprep.subr.mxu0 0.0
        %729 = vmatpush2.msra.mxu0 0.0
        %730 = vmatprep.subr.mxu0 0.0
        %731 = vmatpush2.msra.mxu0 0.0
        %732 = vmatprep.subr.mxu0 0.0
        %733 = vmatpush2.msra.mxu0 0.0
        %734 = vmatprep.subr.mxu0 0.0
        %735 = vmatpush2.msra.mxu0 0.0
        %736 = vmatprep.subr.mxu0 0.0
        %737 = vmatpush2.msra.mxu0 0.0
        %738 = vmatprep.subr.mxu0 0.0
        %739 = vmatpush2.msra.mxu0 0.0
        %740 = vmatprep.subr.mxu0 0.0
        %741 = vmatpush2.msra.mxu0 0.0
        %742 = vmatprep.subr.mxu0 0.0
        %743 = vmatpush2.msra.mxu0 0.0
        %744 = vmatprep.subr.mxu0 0.0
        %745 = vmatpush2.msra.mxu0 0.0
        %746 = vmatprep.subr.mxu0 0.0
        %747 = vmatpush2.msra.mxu0 0.0
        %748 = vmatprep.subr.mxu0 0.0
        %749 = vmatpush2.msra.mxu0 0.0
        %750 = vmatprep.subr.mxu0 0.0
        %751 = vmatpush2.msra.mxu0 0.0
        %752 = vmatprep.mubr.f32.mxu0 0.0
        %753 = vmatmul.mubr.f32.gmra.mxu0 %v686
        %v754 = vpop.f32.mrf.mxu0
        %v755 = vadd.f32 %v683, %v754
        %v756 = vpop.f32.mrf.mxu0
        %757 = vdwg.mxu0
        %v758 = vld [vmem:[%s558] sm:$0xff]
        %v759 = vld [vmem:[%s579] sm:$0xff]
        %v760 = vld [vmem:[%s579 + $0x8] sm:$0xff]
        %v761 = vld [vmem:[%s579 + $0x10] sm:$0xff]
        %v762 = vld [vmem:[%s579 + $0x18] sm:$0xff]
        %v763 = vld [vmem:[%s582] sm:$0x1]
        %v765 = vlaneseq
        %v766 = vshrl.u32 %v765, 7
        %v767 = vsub.s32 0, %v766
        %v768 = vrot.slane %v763, %v767
        %v771 = vsel %vm599, %v758, 0
        %773 = vmatprep.subr.mxu0 0.0
        %774 = vmatpush1.msra.mxu0 0.0
        %775 = vmatprep.subr.mxu0 0.0
        %776 = vmatpush1.msra.mxu0 0.0
        %777 = vmatprep.subr.mxu0 0.0
        %778 = vmatpush1.msra.mxu0 0.0
        %779 = vmatprep.subr.mxu0 0.0
        %780 = vmatpush1.msra.mxu0 0.0
        %781 = vmatprep.subr.mxu0 0.0
        %782 = vmatpush1.msra.mxu0 0.0
        %783 = vmatprep.subr.mxu0 0.0
        %784 = vmatpush1.msra.mxu0 0.0
        %785 = vmatprep.subr.mxu0 0.0
        %786 = vmatpush1.msra.mxu0 0.0
        %787 = vmatprep.subr.mxu0 0.0
        %788 = vmatpush1.msra.mxu0 0.0
        %789 = vmatprep.subr.mxu0 0.0
        %790 = vmatpush1.msra.mxu0 0.0
        %791 = vmatprep.subr.mxu0 0.0
        %792 = vmatpush1.msra.mxu0 0.0
        %793 = vmatprep.subr.mxu0 0.0
        %794 = vmatpush1.msra.mxu0 0.0
        %795 = vmatprep.subr.mxu0 0.0
        %796 = vmatpush1.msra.mxu0 0.0
        %797 = vmatprep.subr.mxu0 0.0
        %798 = vmatpush1.msra.mxu0 %v762
        %799 = vmatprep.subr.mxu0 0.0
        %800 = vmatpush1.msra.mxu0 %v761
        %801 = vmatprep.subr.mxu0 0.0
        %802 = vmatpush1.msra.mxu0 %v760
        %803 = vmatprep.subr.mxu0 0.0
        %804 = vmatpush1.msra.mxu0 %v759
        %805 = vmatprep.subr.mxu0 0.0
        %806 = vmatpush2.msra.mxu0 0.0
        %807 = vmatprep.subr.mxu0 0.0
        %808 = vmatpush2.msra.mxu0 0.0
        %809 = vmatprep.subr.mxu0 0.0
        %810 = vmatpush2.msra.mxu0 0.0
        %811 = vmatprep.subr.mxu0 0.0
        %812 = vmatpush2.msra.mxu0 0.0
        %813 = vmatprep.subr.mxu0 0.0
        %814 = vmatpush2.msra.mxu0 0.0
        %815 = vmatprep.subr.mxu0 0.0
        %816 = vmatpush2.msra.mxu0 0.0
        %817 = vmatprep.subr.mxu0 0.0
        %818 = vmatpush2.msra.mxu0 0.0
        %819 = vmatprep.subr.mxu0 0.0
        %820 = vmatpush2.msra.mxu0 0.0
        %821 = vmatprep.subr.mxu0 0.0
        %822 = vmatpush2.msra.mxu0 0.0
        %823 = vmatprep.subr.mxu0 0.0
        %824 = vmatpush2.msra.mxu0 0.0
        %825 = vmatprep.subr.mxu0 0.0
        %826 = vmatpush2.msra.mxu0 0.0
        %827 = vmatprep.subr.mxu0 0.0
        %828 = vmatpush2.msra.mxu0 0.0
        %829 = vmatprep.subr.mxu0 0.0
        %830 = vmatpush2.msra.mxu0 0.0
        %831 = vmatprep.subr.mxu0 0.0
        %832 = vmatpush2.msra.mxu0 0.0
        %833 = vmatprep.subr.mxu0 0.0
        %834 = vmatpush2.msra.mxu0 0.0
        %835 = vmatprep.subr.mxu0 0.0
        %836 = vmatpush2.msra.mxu0 0.0
        %837 = vmatprep.mubr.f32.mxu0 0.0
        %838 = vmatmul.mubr.f32.gmra.mxu0 %v771
        %v839 = vpop.f32.mrf.mxu0
        %v840 = vadd.f32 %v768, %v839
        %v841 = vpop.f32.mrf.mxu0
        %842 = vdwg.mxu0
        %vm843 = vcmask 64512
        %v845 = vsel %vm843, %v670, 0
        %v848 = vsel %vm843, %v755, 0
        %850 = vmatprep.subr.mxu0 0.0
        %851 = vmatpush1.xpose.msra.mxu0 0.0
        %852 = vmatprep.subr.mxu0 0.0
        %853 = vmatpush1.xpose.msra.mxu0 0.0
        %854 = vmatprep.subr.mxu0 0.0
        %855 = vmatpush1.xpose.msra.mxu0 0.0
        %856 = vmatprep.subr.mxu0 0.0
        %857 = vmatpush1.xpose.msra.mxu0 0.0
        %858 = vmatprep.subr.mxu0 0.0
        %859 = vmatpush1.xpose.msra.mxu0 0.0
        %860 = vmatprep.subr.mxu0 0.0
        %861 = vmatpush1.xpose.msra.mxu0 0.0
        %862 = vmatprep.subr.mxu0 0.0
        %863 = vmatpush1.xpose.msra.mxu0 0.0
        %864 = vmatprep.subr.mxu0 0.0
        %865 = vmatpush1.xpose.msra.mxu0 0.0
        %866 = vmatprep.subr.mxu0 0.0
        %867 = vmatpush1.xpose.msra.mxu0 0.0
        %868 = vmatprep.subr.mxu0 0.0
        %869 = vmatpush1.xpose.msra.mxu0 0.0
        %870 = vmatprep.subr.mxu0 0.0
        %871 = vmatpush1.xpose.msra.mxu0 0.0
        %872 = vmatprep.subr.mxu0 0.0
        %873 = vmatpush1.xpose.msra.mxu0 0.0
        %874 = vmatprep.subr.mxu0 0.0
        %875 = vmatpush1.xpose.msra.mxu0 0.0
        %876 = vmatprep.subr.mxu0 0.0
        %877 = vmatpush1.xpose.msra.mxu0 0.0
        %878 = vmatprep.subr.mxu0 0.0
        %879 = vmatpush1.xpose.msra.mxu0 0.0
        %880 = vmatprep.subr.mxu0 0.0
        %881 = vmatpush1.xpose.msra.mxu0 %v848
        %882 = vmatprep.subr.mxu0 0.0
        %883 = vmatpush2.xpose.msra.mxu0 0.0
        %884 = vmatprep.subr.mxu0 0.0
        %885 = vmatpush2.xpose.msra.mxu0 0.0
        %886 = vmatprep.subr.mxu0 0.0
        %887 = vmatpush2.xpose.msra.mxu0 0.0
        %888 = vmatprep.subr.mxu0 0.0
        %889 = vmatpush2.xpose.msra.mxu0 0.0
        %890 = vmatprep.subr.mxu0 0.0
        %891 = vmatpush2.xpose.msra.mxu0 0.0
        %892 = vmatprep.subr.mxu0 0.0
        %893 = vmatpush2.xpose.msra.mxu0 0.0
        %894 = vmatprep.subr.mxu0 0.0
        %895 = vmatpush2.xpose.msra.mxu0 0.0
        %896 = vmatprep.subr.mxu0 0.0
        %897 = vmatpush2.xpose.msra.mxu0 0.0
        %898 = vmatprep.subr.mxu0 0.0
        %899 = vmatpush2.xpose.msra.mxu0 0.0
        %900 = vmatprep.subr.mxu0 0.0
        %901 = vmatpush2.xpose.msra.mxu0 0.0
        %902 = vmatprep.subr.mxu0 0.0
        %903 = vmatpush2.xpose.msra.mxu0 0.0
        %904 = vmatprep.subr.mxu0 0.0
        %905 = vmatpush2.xpose.msra.mxu0 0.0
        %906 = vmatprep.subr.mxu0 0.0
        %907 = vmatpush2.xpose.msra.mxu0 0.0
        %908 = vmatprep.subr.mxu0 0.0
        %909 = vmatpush2.xpose.msra.mxu0 0.0
        %910 = vmatprep.subr.mxu0 0.0
        %911 = vmatpush2.xpose.msra.mxu0 0.0
        %912 = vmatprep.subr.mxu0 0.0
        %913 = vmatpush2.xpose.msra.mxu0 0.0
        %914 = vmatprep.mubr.f32.mxu0 0.0
        %915 = vmatmul.mubr.f32.gmra.mxu0 %v845
        %v916 = vpop.f32.mrf.mxu0
        %v917 = vadd.f32 0.0, %v916
        %v918 = vpop.f32.mrf.mxu0
        %919 = vdwg.mxu0
        %v920 = vsel %vm843, %v917, -inf
        %921 = vmax.xlane.f32.xlu0 %v920
        %v922 = vpop.xlane.xlu0 %921
        %v923 = vsub.f32 %v917, %v922
        %v924 = vmul.f32 %v923, 1.442695
        %v925 = vpow.pop %v924
        %v926 = vsel %vm843, %v925, 0.0
        %927 = vadd.xlane.f32.xlu0 %v926
        %v928 = vpop.xlane.xlu0 %927
        %v929 = vrcp.pop %v928
        %v930 = vmul.f32 %v925, %v929
        %931 = vst.msk [vmem:[%s546] sm:$0xff] %vm843, %v930
        %v933 = vsel %vm843, %v930, 0
        %935 = vmatprep.subr.mxu0 0.0
        %936 = vmatpush1.msra.mxu0 0.0
        %937 = vmatprep.subr.mxu0 0.0
        %938 = vmatpush1.msra.mxu0 0.0
        %939 = vmatprep.subr.mxu0 0.0
        %940 = vmatpush1.msra.mxu0 0.0
        %941 = vmatprep.subr.mxu0 0.0
        %942 = vmatpush1.msra.mxu0 0.0
        %943 = vmatprep.subr.mxu0 0.0
        %944 = vmatpush1.msra.mxu0 0.0
        %945 = vmatprep.subr.mxu0 0.0
        %946 = vmatpush1.msra.mxu0 0.0
        %947 = vmatprep.subr.mxu0 0.0
        %948 = vmatpush1.msra.mxu0 0.0
        %949 = vmatprep.subr.mxu0 0.0
        %950 = vmatpush1.msra.mxu0 0.0
        %951 = vmatprep.subr.mxu0 0.0
        %952 = vmatpush1.msra.mxu0 0.0
        %953 = vmatprep.subr.mxu0 0.0
        %954 = vmatpush1.msra.mxu0 0.0
        %955 = vmatprep.subr.mxu0 0.0
        %956 = vmatpush1.msra.mxu0 0.0
        %957 = vmatprep.subr.mxu0 0.0
        %958 = vmatpush1.msra.mxu0 0.0
        %959 = vmatprep.subr.mxu0 0.0
        %960 = vmatpush1.msra.mxu0 0.0
        %961 = vmatprep.subr.mxu0 0.0
        %962 = vmatpush1.msra.mxu0 0.0
        %963 = vmatprep.subr.mxu0 0.0
        %964 = vmatpush1.msra.mxu0 0.0
        %965 = vmatprep.subr.mxu0 0.0
        %966 = vmatpush1.msra.mxu0 %v840
        %967 = vmatprep.subr.mxu0 0.0
        %968 = vmatpush2.msra.mxu0 0.0
        %969 = vmatprep.subr.mxu0 0.0
        %970 = vmatpush2.msra.mxu0 0.0
        %971 = vmatprep.subr.mxu0 0.0
        %972 = vmatpush2.msra.mxu0 0.0
        %973 = vmatprep.subr.mxu0 0.0
        %974 = vmatpush2.msra.mxu0 0.0
        %975 = vmatprep.subr.mxu0 0.0
        %976 = vmatpush2.msra.mxu0 0.0
        %977 = vmatprep.subr.mxu0 0.0
        %978 = vmatpush2.msra.mxu0 0.0
        %979 = vmatprep.subr.mxu0 0.0
        %980 = vmatpush2.msra.mxu0 0.0
        %981 = vmatprep.subr.mxu0 0.0
        %982 = vmatpush2.msra.mxu0 0.0
        %983 = vmatprep.subr.mxu0 0.0
        %984 = vmatpush2.msra.mxu0 0.0
        %985 = vmatprep.subr.mxu0 0.0
        %986 = vmatpush2.msra.mxu0 0.0
        %987 = vmatprep.subr.mxu0 0.0
        %988 = vmatpush2.msra.mxu0 0.0
        %989 = vmatprep.subr.mxu0 0.0
        %990 = vmatpush2.msra.mxu0 0.0
        %991 = vmatprep.subr.mxu0 0.0
        %992 = vmatpush2.msra.mxu0 0.0
        %993 = vmatprep.subr.mxu0 0.0
        %994 = vmatpush2.msra.mxu0 0.0
        %995 = vmatprep.subr.mxu0 0.0
        %996 = vmatpush2.msra.mxu0 0.0
        %997 = vmatprep.subr.mxu0 0.0
        %998 = vmatpush2.msra.mxu0 0.0
        %999 = vmatprep.mubr.f32.mxu0 0.0
        %1000 = vmatmul.mubr.f32.gmra.mxu0 %v933
        %v1001 = vpop.f32.mrf.mxu0
        %v1002 = vadd.f32 0.0, %v1001
        %v1003 = vpop.f32.mrf.mxu0
        %1004 = vdwg.mxu0
        %p1005 = scmp.eq.s32.totalorder %s35, 0
        // Predicated region
        $region65: #{tpu_custom_call.1} parent=63 // pred_check
          %p1006 = pneg %p1005
        $region66: #{tpu_custom_call.1} parent=63 // pred_check_branch
          %1008 = sbr.rel (%p1006) target = $region68
        $region67: #{tpu_custom_call.1} parent=63 // pred_region
          %v1009 = vld [vmem:[%s10] sm:$0x1]
          %v1011 = vlaneseq
          %v1012 = vshrl.u32 %v1011, 7
          %v1013 = vsub.s32 0, %v1012
          %v1014 = vrot.slane %v1009, %v1013
          %1016 = vst.msk [vmem:[#allocation2] sm:$0xff] %vm599, %v1014
        $region68: #{tpu_custom_call.1} parent=63 // pred_fallthru
          _
        %v1017 = vld [vmem:[#allocation2] sm:$0xff]
        %v1018 = vld [vmem:[%s586] sm:$0xff]
        %v1020 = vsel %vm843, %v1002, 0
        %1022 = vmatprep.subr.mxu0 0.0
        %1023 = vmatpush1.msra.mxu0 0.0
        %1024 = vmatprep.subr.mxu0 0.0
        %1025 = vmatpush1.msra.mxu0 0.0
        %1026 = vmatprep.subr.mxu0 0.0
        %1027 = vmatpush1.msra.mxu0 0.0
        %1028 = vmatprep.subr.mxu0 0.0
        %1029 = vmatpush1.msra.mxu0 0.0
        %1030 = vmatprep.subr.mxu0 0.0
        %1031 = vmatpush1.msra.mxu0 0.0
        %1032 = vmatprep.subr.mxu0 0.0
        %1033 = vmatpush1.msra.mxu0 0.0
        %1034 = vmatprep.subr.mxu0 0.0
        %1035 = vmatpush1.msra.mxu0 0.0
        %1036 = vmatprep.subr.mxu0 0.0
        %1037 = vmatpush1.msra.mxu0 0.0
        %1038 = vmatprep.subr.mxu0 0.0
        %1039 = vmatpush1.msra.mxu0 0.0
        %1040 = vmatprep.subr.mxu0 0.0
        %1041 = vmatpush1.msra.mxu0 0.0
        %1042 = vmatprep.subr.mxu0 0.0
        %1043 = vmatpush1.msra.mxu0 0.0
        %1044 = vmatprep.subr.mxu0 0.0
        %1045 = vmatpush1.msra.mxu0 0.0
        %1046 = vmatprep.subr.mxu0 0.0
        %1047 = vmatpush1.msra.mxu0 0.0
        %1048 = vmatprep.subr.mxu0 0.0
        %1049 = vmatpush1.msra.mxu0 0.0
        %1050 = vmatprep.subr.mxu0 0.0
        %1051 = vmatpush1.msra.mxu0 0.0
        %1052 = vmatprep.subr.mxu0 0.0
        %1053 = vmatpush1.msra.mxu0 %v1018
        %1054 = vmatprep.subr.mxu0 0.0
        %1055 = vmatpush2.msra.mxu0 0.0
        %1056 = vmatprep.subr.mxu0 0.0
        %1057 = vmatpush2.msra.mxu0 0.0
        %1058 = vmatprep.subr.mxu0 0.0
        %1059 = vmatpush2.msra.mxu0 0.0
        %1060 = vmatprep.subr.mxu0 0.0
        %1061 = vmatpush2.msra.mxu0 0.0
        %1062 = vmatprep.subr.mxu0 0.0
        %1063 = vmatpush2.msra.mxu0 0.0
        %1064 = vmatprep.subr.mxu0 0.0
        %1065 = vmatpush2.msra.mxu0 0.0
        %1066 = vmatprep.subr.mxu0 0.0
        %1067 = vmatpush2.msra.mxu0 0.0
        %1068 = vmatprep.subr.mxu0 0.0
        %1069 = vmatpush2.msra.mxu0 0.0
        %1070 = vmatprep.subr.mxu0 0.0
        %1071 = vmatpush2.msra.mxu0 0.0
        %1072 = vmatprep.subr.mxu0 0.0
        %1073 = vmatpush2.msra.mxu0 0.0
        %1074 = vmatprep.subr.mxu0 0.0
        %1075 = vmatpush2.msra.mxu0 0.0
        %1076 = vmatprep.subr.mxu0 0.0
        %1077 = vmatpush2.msra.mxu0 0.0
        %1078 = vmatprep.subr.mxu0 0.0
        %1079 = vmatpush2.msra.mxu0 0.0
        %1080 = vmatprep.subr.mxu0 0.0
        %1081 = vmatpush2.msra.mxu0 0.0
        %1082 = vmatprep.subr.mxu0 0.0
        %1083 = vmatpush2.msra.mxu0 0.0
        %1084 = vmatprep.subr.mxu0 0.0
        %1085 = vmatpush2.msra.mxu0 0.0
        %1086 = vmatprep.mubr.f32.mxu0 0.0
        %1087 = vmatmul.mubr.f32.gmra.mxu0 %v1020
        %v1088 = vpop.f32.mrf.mxu0
        %v1089 = vadd.f32 0.0, %v1088
        %v1090 = vpop.f32.mrf.mxu0
        %1091 = vdwg.mxu0
        %v1092 = vadd.f32 %v1017, %v1089
        %1093 = vst.msk [vmem:[#allocation2] sm:$0xff] %vm599, %v1092
        %p1094 = scmp.eq.s32.totalorder %s35, 3
        // Predicated region
        $region69: #{tpu_custom_call.1} parent=63 // pred_check
          %p1095 = pneg %p1094
        $region70: #{tpu_custom_call.1} parent=63 // pred_check_branch
          %1097 = sbr.rel (%p1095) target = $region72
        $region71: #{tpu_custom_call.1} parent=63 // pred_region
          %v1098 = vld [vmem:[#allocation2] sm:$0xff]
          %1099 = vst.msk [vmem:[%s539] sm:$0xff] %vm599, %v1098
        $region72: #{tpu_custom_call.1} parent=63 // pred_fallthru
          _
        %s1100 = sand.u32 %s331, 1
        %s1101 = scalar_lea.sflag [#allocation4], %s1100
        %s1102 = sand.u32 %s331, 1
        %s1103 = smul.addr %s1102, 8
        %s1104 = scalar_lea.vmem [#allocation3], %s1103
        %s1105 = sand.u32 %s359, 1
        %s1106 = scalar_lea.sflag [#allocation6], %s1105
        %s1107 = sand.u32 %s359, 1
        %s1108 = smul.addr %s1107, 8
        %s1109 = scalar_lea.vmem [#allocation5], %s1108
        // Predicated region
        $region73: #{tpu_custom_call.1} parent=63 // pred_check
          %p1110 = pneg %p341
        $region74: #{tpu_custom_call.1} parent=63 // pred_check_branch
          %1112 = sbr.rel (%p1110) target = $region76
        $region75: #{tpu_custom_call.1} parent=63 // pred_region
          %s1114 = ssub.s32 128, 128
          %1115 = vsyncadd %s1101, %s1114
          %s1116 = smul.addr %s34, 128
          %s1117 = scalar_lea.hbm %s11, %s1116
          %s1119 = sshll.u32 %s1104, 4
          %s1120 = int_to_ptr.vmem [resolvable:$true] %s1119
          %1122 = dma.vmem_to_hbm [thread:$0]  %s1120, 128, %s1117, %s1101
        $region76: #{tpu_custom_call.1} parent=63 // pred_fallthru
          _
        // Predicated region
        $region77: #{tpu_custom_call.1} parent=63 // pred_check
          %p1123 = pneg %p369
        $region78: #{tpu_custom_call.1} parent=63 // pred_check_branch
          %1125 = sbr.rel (%p1123) target = $region80
        $region79: #{tpu_custom_call.1} parent=63 // pred_region
          %s1127 = ssub.s32 128, 128
          %1128 = vsyncadd %s1106, %s1127
          %s1129 = smul.addr %s34, 4
          %s1130 = sadd.s32 %s35, %s1129
          %s1131 = smul.addr %s1130, 128
          %s1132 = scalar_lea.hbm %s12, %s1131
          %s1134 = sshll.u32 %s1109, 4
          %s1135 = int_to_ptr.vmem [resolvable:$true] %s1134
          %1137 = dma.vmem_to_hbm [thread:$0]  %s1135, 128, %s1132, %s1106
        $region80: #{tpu_custom_call.1} parent=63 // pred_fallthru
          _
      $region64: #{tpu_custom_call.1} parent=5 // pred_fallthru
        _
      %p1138 = scmp.le.s32.totalorder 2, %s25
      // Predicated region
      $region81: #{tpu_custom_call.1} parent=5 // pred_check
        %p1139 = pneg %p1138
      $region82: #{tpu_custom_call.1} parent=5 // pred_check_branch
        %1141 = sbr.rel (%p1139) target = $region84
      $region83: #{tpu_custom_call.1} parent=5 // pred_region
        %s1142 = ssub.s32 %s25, 2
        // Predicated region
        $region85: #{tpu_custom_call.1} parent=83 // pred_check
          %p1143 = pneg %p347
        $region86: #{tpu_custom_call.1} parent=83 // pred_check_branch
          %1145 = sbr.rel (%p1143) target = $region88
        $region87: #{tpu_custom_call.1} parent=83 // pred_region
          %s1146 = sand.u32 %s332, 1
          %s1147 = scalar_lea.sflag [#allocation4], %s1146
          %s1148 = sand.u32 %s332, 1
          %s1149 = smul.addr %s1148, 8
          %s1150 = scalar_lea.vmem [#allocation3], %s1149
          %1151 = dma.done %s1147, 128
        $region88: #{tpu_custom_call.1} parent=83 // pred_fallthru
          _
        // Predicated region
        $region89: #{tpu_custom_call.1} parent=83 // pred_check
          %p1152 = pneg %p375
        $region90: #{tpu_custom_call.1} parent=83 // pred_check_branch
          %1154 = sbr.rel (%p1152) target = $region92
        $region91: #{tpu_custom_call.1} parent=83 // pred_region
          %s1155 = sand.u32 %s360, 1
          %s1156 = scalar_lea.sflag [#allocation6], %s1155
          %s1157 = sand.u32 %s360, 1
          %s1158 = smul.addr %s1157, 8
          %s1159 = scalar_lea.vmem [#allocation5], %s1158
          %1160 = dma.done %s1156, 128
        $region92: #{tpu_custom_call.1} parent=83 // pred_fallthru
          _
      $region84: #{tpu_custom_call.1} parent=5 // pred_fallthru
        _
    $region6: #{tpu_custom_call.1} parent=1 // loop_footer
      %s29 = sadd.s32 1, %s25
    $region7: #{tpu_custom_call.1} parent=1 // loop_footer_branch
      %24 = sbr.rel target = $region3
    $region8: #{tpu_custom_call.1} parent=1 // loop_exit
      _
    %1161 = vsyncpa [#allocation4], 1
    %s1162 = scalar_lea.sflag [#allocation4], 1
    %1163 = vsyncpa %s1162, 1
    %1164 = vsyncpa [#allocation6], 1
    %s1165 = scalar_lea.sflag [#allocation6], 1
    %1166 = vsyncpa %s1165, 1

</llo_original>
